<compile_context>
chip_gen: v7x
topology: tpu7x:2x2x1
jax: 0.10.0
libtpu: 0.0.40
codegen_flags: <defaults>
</compile_context>

<pallas_src>
import functools

import jax
import jax.numpy as jnp
from jax.experimental import pallas as pl
from jax.experimental.pallas import tpu as pltpu


def _round_up(x, m):
    return (x + m - 1) // m * m


def _range_bound_loss_kernel(params_ref, x_ref, o_ref, *,
                             m_total, tile_rows, lanes, grid_j, need_mask):
    """One (tile_rows, lanes) slab block -> scalar partial added into o_ref.

    params_ref : SMEM (2,) f32             -- [lb, ub]
    x_ref      : VMEM (tile_rows, lanes)   -- input block (f32 or bf16)
    o_ref      : VMEM (8, 128) f32         -- per-grid-slice partial accumulator
                 (block index depends only on the parallel axis, so it stays
                 resident across the reduction axis).
    """
    c_idx = pl.program_id(0)   # parallel slice (TensorCore split on v7x)
    j = pl.program_id(1)       # row-block index within the slice (reduction)

    @pl.when(j == 0)
    def _init():
        o_ref[...] = jnp.zeros_like(o_ref)

    x = x_ref[...]
    # Bounds as (1, 1) vectors in the input dtype: bf16 inputs keep the whole
    # penalty computation on packed bf16 vregs; f32 path is unchanged.
    lb = jnp.full((1, 1), params_ref[0], jnp.float32).astype(x.dtype)
    ub = jnp.full((1, 1), params_ref[1], jnp.float32).astype(x.dtype)

    # relu(x - ub) + relu(lb - x); widen to f32 only for accumulation.
    penalty = (jnp.maximum(x - ub, 0.0) + jnp.maximum(lb - x, 0.0)).astype(jnp.float32)

    if need_mask:
        block_elems = tile_rows * lanes
        g = c_idx * grid_j + j            # global row-block index
        block_end = (g + 1) * block_elems

        @pl.when(block_end <= m_total)    # fully-valid block: plain reduce
        def _full():
            o_ref[...] += jnp.sum(penalty)

        @pl.when(block_end > m_total)     # block contains zero-padded elements
        def _tail():
            row = jax.lax.broadcasted_iota(jnp.int32, penalty.shape, 0)
            col = jax.lax.broadcasted_iota(jnp.int32, penalty.shape, 1)
            flat = g * block_elems + row * lanes + col
            o_ref[...] += jnp.sum(jnp.where(flat < m_total, penalty, 0.0))
    else:
        o_ref[...] += jnp.sum(penalty)


def _bound_group_penalty_sum(x_flat, lb_i, ub_i, *, tile_rows, lanes):
    """Sum of relu(x - ub) + relu(lb - x) over one flattened bound group."""
    m = x_flat.shape[0]
    min_rows = 16 if x_flat.dtype == jnp.bfloat16 else 8

    rows_needed = max(1, pl.cdiv(m, lanes))
    tr = min(_round_up(tile_rows, min_rows), _round_up(rows_needed, min_rows))
    total_blocks = pl.cdiv(rows_needed, tr)
    n_split = 2 if total_blocks >= 2 else 1          # both TensorCores on v7x
    grid_j = pl.cdiv(total_blocks, n_split)
    rows_padded = n_split * grid_j * tr
    padded_len = rows_padded * lanes
    need_mask = padded_len != m

    if need_mask:
        # Zero-pad to a whole number of blocks; padded elements are masked out
        # in the kernel (only on the tail blocks). For NN-produced inputs this
        # pad fuses with the producer.
        x_flat = jnp.pad(x_flat, (0, padded_len - m))
    x2d = x_flat.reshape(rows_padded, lanes)

    params = jnp.stack([lb_i, ub_i]).astype(jnp.float32)      # (2,) -> SMEM

    block_bytes = tr * lanes * x2d.dtype.itemsize
    # Double-buffered input + headroom, explicit so the same tiling is safe on
    # v5e/v6e (128 MiB VMEM) and v7x (64 MiB physical / 32 MiB scoped default).
    vmem_limit = int(min(64 * 1024 * 1024, max(8 * 1024 * 1024, 4 * block_bytes)))

    kernel = functools.partial(
        _range_bound_loss_kernel,
        m_total=m, tile_rows=tr, lanes=lanes, grid_j=grid_j, need_mask=need_mask)

    partials = pl.pallas_call(
        kernel,
        out_shape=jax.ShapeDtypeStruct((n_split * 8, 128), jnp.float32),
        grid=(n_split, grid_j),
        in_specs=[
            pl.BlockSpec(memory_space=pltpu.MemorySpace.SMEM),            # [lb, ub]
            pl.BlockSpec((tr, lanes), lambda c, j: (c * grid_j + j, 0)),  # input slab
        ],
        out_specs=pl.BlockSpec((8, 128), lambda c, j: (c, 0)),            # per-slice partial
        compiler_params=pltpu.CompilerParams(
            dimension_semantics=("parallel", "arbitrary"),
            vmem_limit_bytes=vmem_limit,
        ),
    )(params, x2d)

    # Every element of slice c's (8,128) block equals that slice's total.
    return jnp.sum(partials[0::8, 0])


def range_bound_loss(inputs, lb, ub, factor, *, tile_rows=512, lanes=1024):
    """Pallas forward of RangeBoundLoss.

    inputs: (N, ...) — row i is the i-th bounded tensor of the PyTorch loop.
    lb, ub: (N,) per-group bounds; factor: scalar weight. Returns scalar loss.
    """
    assert lanes % 128 == 0
    inputs = jnp.asarray(inputs)
    n = inputs.shape[0]
    flat = inputs.reshape(n, -1)
    if flat.dtype not in (jnp.float32, jnp.bfloat16):
        flat = flat.astype(jnp.float32)
    m = flat.shape[1]

    lb = jnp.asarray(lb, jnp.float32).reshape(-1)
    ub = jnp.asarray(ub, jnp.float32).reshape(-1)
    scale = jnp.asarray(factor, jnp.float32) / (2.0 * m)   # factor * mean(.) / 2

    loss = jnp.float32(0.0)
    for i in range(n):          # N == 1 in the module's actual config
        total_i = _bound_group_penalty_sum(flat[i], lb[i], ub[i],
                                           tile_rows=tile_rows, lanes=lanes)
        loss = loss + scale * total_i
    return loss


def range_bound_loss_ref(inputs, lb, ub, factor):
    """Pure-JAX reference mirroring the PyTorch forward loop."""
    inputs = jnp.asarray(inputs).astype(jnp.float32)
    lb = jnp.asarray(lb, jnp.float32)
    ub = jnp.asarray(ub, jnp.float32)
    loss = jnp.float32(0.0)
    for i in range(inputs.shape[0]):
        upper = jnp.maximum(inputs[i] - ub[i], 0.0)
        lower = jnp.maximum(lb[i] - inputs[i], 0.0)
        loss = loss + jnp.asarray(factor, jnp.float32) * jnp.mean(upper + lower) / 2.0
    return loss


if __name__ == "__main__":
    key = jax.random.PRNGKey(0)
    k1, k2 = jax.random.split(key)

    # Mirrors the module __init__: single-element bound lists from the config.
    lb = jnp.array([0.9], dtype=jnp.float32)   # weighting_nn.loss_lower_bound
    ub = jnp.array([1.1], dtype=jnp.float32)   # weighting_nn.loss_upper_bound
    factor = 1.0                               # weighting_nn.loss_factor

    # Case 1: module-like small shape (one bound group, short vector).
    # Exercises the single-block path with a masked tail.
    x_small = jax.random.uniform(k1, (1, 2500), jnp.float32, 0.5, 1.5)
    loss1 = jax.block_until_ready(range_bound_loss(x_small, lb, ub, factor))
    ref1 = range_bound_loss_ref(x_small, lb, ub, factor)
    assert jnp.allclose(loss1, ref1, rtol=1e-5, atol=1e-6), (float(loss1), float(ref1))

    # Case 2: multiple row blocks with tiny tiles -> exercises the 2-way
    # "parallel" split, the cross-block accumulation, and a fully-padded block.
    x_mid = jax.random.uniform(k2, (1, 40960), jnp.float32, 0.5, 1.5)
    loss2 = jax.block_until_ready(range_bound_loss(x_mid, lb, ub, factor, tile_rows=8))
    ref2 = range_bound_loss_ref(x_mid, lb, ub, factor)
    assert jnp.allclose(loss2, ref2, rtol=1e-5, atol=1e-6), (float(loss2), float(ref2))

    # Case 3: bf16 inputs (bf16 VPU math, f32 accumulation). Looser tolerance:
    # the bounds are quantized to bf16 inside the kernel.
    x_bf16 = x_mid.astype(jnp.bfloat16)
    loss3 = jax.block_until_ready(range_bound_loss(x_bf16, lb, ub, factor, tile_rows=16))
    ref3 = range_bound_loss_ref(x_bf16, lb, ub, factor)
    assert jnp.allclose(loss3, ref3, rtol=3e-2, atol=1e-3), (float(loss3), float(ref3))

    print("KERNEL_OK")
</pallas_src>

<mosaic_0001>
module attributes {stable_mosaic.version = 11 : i64} {
  func.func @_range_bound_loss_kernel(%arg0: i32, %arg1: i32, %arg2: memref<2xf32, #tpu.memory_space<smem>>, %arg3: memref<8x1024xf32, #tpu.memory_space<vmem>>, %arg4: memref<8x128xf32, #tpu.memory_space<vmem>>) attributes {dimension_semantics = [#tpu.dimension_semantics<parallel>, #tpu.dimension_semantics<arbitrary>], iteration_bounds = array<i64: 1, 1>, scalar_prefetch = 0 : i64, scratch_operands = 0 : i64, tpu.core_type = #tpu.core_type<tc>, window_params = [{transform_indices = @transform_0, window_bounds = array<i64: 2>}, {transform_indices = @transform_1, window_bounds = array<i64: 8, 1024>}, {transform_indices = @transform_2, window_bounds = array<i64: 8, 128>}]} {
    %c0_i32 = arith.constant 0 : i32
    %0 = arith.cmpi eq, %arg1, %c0_i32 : i32
    %1 = arith.extui %0 : i1 to i32
    %c0_i32_0 = arith.constant 0 : i32
    %2 = arith.cmpi ne, %1, %c0_i32_0 : i32
    scf.if %2 {
      %cst_8 = arith.constant 0.000000e+00 : f32
      %27 = vector.broadcast %cst_8 : f32 to vector<8x128xf32>
      %c0_9 = arith.constant 0 : index
      %c0_10 = arith.constant 0 : index
      %28 = vector.load %arg4[%c0_9, %c0_10] : memref<8x128xf32, #tpu.memory_space<vmem>>, vector<8x128xf32>
      tpu.vector_store %arg4[%c0_9, %c0_10], %27 {strides = array<i32>} : memref<8x128xf32, #tpu.memory_space<vmem>>, vector<8x128xf32>,
    } else {
    }
    %c0 = arith.constant 0 : index
    %c0_1 = arith.constant 0 : index
    %3 = vector.load %arg3[%c0, %c0_1] : memref<8x1024xf32, #tpu.memory_space<vmem>>, vector<8x1024xf32>
    %c0_2 = arith.constant 0 : index
    %4 = memref.load %arg2[%c0_2] : memref<2xf32, #tpu.memory_space<smem>>
    %5 = vector.broadcast %4 : f32 to vector<1x1xf32>
    %c1 = arith.constant 1 : index
    %6 = memref.load %arg2[%c1] : memref<2xf32, #tpu.memory_space<smem>>
    %7 = vector.broadcast %6 : f32 to vector<1x1xf32>
    %8 = vector.broadcast %7 : vector<1x1xf32> to vector<8x1024xf32>
    %9 = arith.subf %3, %8 : vector<8x1024xf32>
    %cst = arith.constant 0.000000e+00 : f32
    %10 = vector.broadcast %cst : f32 to vector<8x1024xf32>
    %11 = arith.maximumf %9, %10 : vector<8x1024xf32>
    %12 = vector.broadcast %5 : vector<1x1xf32> to vector<8x1024xf32>
    %13 = arith.subf %12, %3 : vector<8x1024xf32>
    %cst_3 = arith.constant 0.000000e+00 : f32
    %14 = vector.broadcast %cst_3 : f32 to vector<8x1024xf32>
    %15 = arith.maximumf %13, %14 : vector<8x1024xf32>
    %16 = arith.addf %11, %15 : vector<8x1024xf32>
    %c1_i32 = arith.constant 1 : i32
    %17 = arith.muli %arg0, %c1_i32 : i32
    %18 = arith.addi %17, %arg1 : i32
    %c1_i32_4 = arith.constant 1 : i32
    %19 = arith.addi %18, %c1_i32_4 : i32
    %c8192_i32 = arith.constant 8192 : i32
    %20 = arith.muli %19, %c8192_i32 : i32
    %c2500_i32 = arith.constant 2500 : i32
    %21 = arith.cmpi sle, %20, %c2500_i32 : i32
    %22 = arith.extui %21 : i1 to i32
    %c0_i32_5 = arith.constant 0 : i32
    %23 = arith.cmpi ne, %22, %c0_i32_5 : i32
    scf.if %23 {
      %c0_8 = arith.constant 0 : index
      %c0_9 = arith.constant 0 : index
      %27 = vector.load %arg4[%c0_8, %c0_9] : memref<8x128xf32, #tpu.memory_space<vmem>>, vector<8x128xf32>
      %28 = vector.shape_cast %16 : vector<8x1024xf32> to vector<1x8x1024xf32>
      %cst_10 = arith.constant dense<0.000000e+00> : vector<1xf32>
      %29 = vector.multi_reduction <add>, %28, %cst_10 [1, 2] : vector<1x8x1024xf32> to vector<1xf32>
      %30 = vector.shape_cast %29 : vector<1xf32> to vector<1x1x1xf32>
      %31 = vector.extract %30[0, 0, 0] : f32 from vector<1x1x1xf32>
      %32 = vector.broadcast %31 : f32 to vector<8x128xf32>
      %33 = arith.addf %27, %32 : vector<8x128xf32>
      %c0_11 = arith.constant 0 : index
      %c0_12 = arith.constant 0 : index
      %34 = vector.load %arg4[%c0_11, %c0_12] : memref<8x128xf32, #tpu.memory_space<vmem>>, vector<8x128xf32>
      tpu.vector_store %arg4[%c0_11, %c0_12], %33 {strides = array<i32>} : memref<8x128xf32, #tpu.memory_space<vmem>>, vector<8x128xf32>,
    } else {
    }
    %c2500_i32_6 = arith.constant 2500 : i32
    %24 = arith.cmpi sgt, %20, %c2500_i32_6 : i32
    %25 = arith.extui %24 : i1 to i32
    %c0_i32_7 = arith.constant 0 : i32
    %26 = arith.cmpi ne, %25, %c0_i32_7 : i32
    scf.if %26 {
      %27 = tpu.iota {dimensions = array<i32: 0>} : vector<8x1024xi32>
      %28 = tpu.iota {dimensions = array<i32: 1>} : vector<8x1024xi32>
      %c8192_i32_8 = arith.constant 8192 : i32
      %29 = arith.muli %18, %c8192_i32_8 : i32
      %c1024_i32 = arith.constant 1024 : i32
      %30 = vector.broadcast %c1024_i32 : i32 to vector<8x1024xi32>
      %31 = arith.muli %27, %30 : vector<8x1024xi32>
      %32 = vector.broadcast %29 : i32 to vector<8x1024xi32>
      %33 = arith.addi %32, %31 : vector<8x1024xi32>
      %34 = arith.addi %33, %28 : vector<8x1024xi32>
      %c0_9 = arith.constant 0 : index
      %c0_10 = arith.constant 0 : index
      %35 = vector.load %arg4[%c0_9, %c0_10] : memref<8x128xf32, #tpu.memory_space<vmem>>, vector<8x128xf32>
      %c2500_i32_11 = arith.constant 2500 : i32
      %36 = vector.broadcast %c2500_i32_11 : i32 to vector<8x1024xi32>
      %37 = arith.cmpi slt, %34, %36 : vector<8x1024xi32>
      %cst_12 = arith.constant 0.000000e+00 : f32
      %38 = vector.broadcast %cst_12 : f32 to vector<8x1024xf32>
      %39 = arith.select %37, %16, %38 : vector<8x1024xi1>, vector<8x1024xf32>
      %40 = vector.shape_cast %39 : vector<8x1024xf32> to vector<1x8x1024xf32>
      %cst_13 = arith.constant dense<0.000000e+00> : vector<1xf32>
      %41 = vector.multi_reduction <add>, %40, %cst_13 [1, 2] : vector<1x8x1024xf32> to vector<1xf32>
      %42 = vector.shape_cast %41 : vector<1xf32> to vector<1x1x1xf32>
      %43 = vector.extract %42[0, 0, 0] : f32 from vector<1x1x1xf32>
      %44 = vector.broadcast %43 : f32 to vector<8x128xf32>
      %45 = arith.addf %35, %44 : vector<8x128xf32>
      %c0_14 = arith.constant 0 : index
      %c0_15 = arith.constant 0 : index
      %46 = vector.load %arg4[%c0_14, %c0_15] : memref<8x128xf32, #tpu.memory_space<vmem>>, vector<8x128xf32>
      tpu.vector_store %arg4[%c0_14, %c0_15], %45 {strides = array<i32>} : memref<8x128xf32, #tpu.memory_space<vmem>>, vector<8x128xf32>,
    } else {
    }
    return
  }
  func.func @transform_0(%arg0: i32, %arg1: i32) -> i32 {
    %c0_i32 = arith.constant 0 : i32
    %c0_i32_0 = arith.constant 0 : i32
    return %c0_i32 : i32
  }
  func.func @transform_1(%arg0: i32, %arg1: i32) -> (i32, i32) {
    %c1_i32 = arith.constant 1 : i32
    %0 = arith.muli %arg0, %c1_i32 : i32
    %1 = arith.addi %0, %arg1 : i32
    %c0_i32 = arith.constant 0 : i32
    %c0_i32_0 = arith.constant 0 : i32
    return %1, %c0_i32 : i32, i32
  }
  func.func @transform_2(%arg0: i32, %arg1: i32) -> (i32, i32) {
    %c0_i32 = arith.constant 0 : i32
    %c0_i32_0 = arith.constant 0 : i32
    return %arg0, %c0_i32 : i32, i32
  }
}

</mosaic_0001>

<llo_original>
// kernel: tpu_custom_call.1
$region0: #{tpu_custom_call.1}
  #allocation0 [shape = 'u32[]', space=smem, size = 0x4, offset = 0x4, fixed_abs, tag = 'smem constant byte address 0x4 - core index']
  #allocation1 [shape = 'u32[144,128]{1,0:T(1,128)}', space=vmem, size = 0x12000, scoped, tag = 'internal scratch']
  %s0 = inlined_call_operand.hbm [shape: f32[2], index: 0, kind: input, shape index: {}]
  %s1 = inlined_call_operand.hbm [shape: f32[8,1024], index: 1, kind: input, shape index: {}]
  %s2 = inlined_call_operand.hbm [shape: f32[8,128], index: 2, kind: output, shape index: {}]
  %s3 = sld [smem:[#allocation0]]
  $region38: #{tpu_custom_call.1} parent=0
    _
  %s5 = ssub.s32 1, %s3
  %s6 = scalar_select 0, %s5, %s3
  $region1: #{tpu_custom_call.1} parent=0
    #allocation2 [shape = 'u8[512]{0}', space=smem, size = 0x200, scoped, tag = 'input window, operand 0, single buffered']
    #allocation3 [shape = 's32[1]{0}', space=sflag, size = 0x4, scoped, tag = 'scoped memory for tpu_custom_call.1']
    #allocation4 [shape = 's32[1]{0}', space=sflag, size = 0x4, scoped, tag = 'scoped memory for tpu_custom_call.1']
    #allocation5 [shape = 's32[1]{0}', space=sflag, size = 0x4, scoped, tag = 'scoped memory for tpu_custom_call.1']
    #allocation6 [shape = 'u8[32768]{0}', space=vmem, size = 0x8000, scoped, tag = 'input window, operand 1, single buffered']
    #allocation7 [shape = 'u8[4096]{0}', space=vmem, size = 0x1000, scoped, tag = 'output window, operand 0, single buffered']
    %7 = vsyncpa [#allocation5], 0
    %8 = vsyncpa [#allocation3], 0
    %9 = vsyncpa [#allocation4], 0
    // Predicated region
    $region2: #{tpu_custom_call.1} parent=1 // pred_check
      _
    $region3: #{tpu_custom_call.1} parent=1 // pred_check_branch
      %11 = sbr.rel (0) target = $region5
    $region4: #{tpu_custom_call.1} parent=1 // pred_region
      %s13 = ssub.s32 16, 16
      %14 = vsyncadd [#allocation5], %s13
      %17 = dma.hbm_to_smem %s0, 16, [#allocation2], [#allocation5]
    $region5: #{tpu_custom_call.1} parent=1 // pred_fallthru
      _
    // Predicated region
    $region6: #{tpu_custom_call.1} parent=1 // pred_check
      _
    $region7: #{tpu_custom_call.1} parent=1 // pred_check_branch
      %19 = sbr.rel (0) target = $region9
    $region8: #{tpu_custom_call.1} parent=1 // pred_region
      %s20 = sadd.s32 0, 0
      %s22 = ssub.s32 1024, 1024
      %23 = vsyncadd [#allocation3], %s22
      %s24 = smul.addr %s20, 8
      %s25 = smul.addr %s24, 128
      %s26 = scalar_lea.hbm %s1, %s25
      %s28 = sshll.u32 [#allocation6], 4
      %s29 = int_to_ptr.vmem [resolvable:$true] %s28
      %31 = dma.hbm_to_vmem [thread:$0]  %s26, 1024, %s29, [#allocation3]
    $region9: #{tpu_custom_call.1} parent=1 // pred_fallthru
      _
    // Predicated region
    $region10: #{tpu_custom_call.1} parent=1 // pred_check
      _
    $region11: #{tpu_custom_call.1} parent=1 // pred_check_branch
      %33 = sbr.rel (0) target = $region13
    $region12: #{tpu_custom_call.1} parent=1 // pred_region
      %34 = dma.done [#allocation5], 16
    $region13: #{tpu_custom_call.1} parent=1 // pred_fallthru
      _
    // Predicated region
    $region14: #{tpu_custom_call.1} parent=1 // pred_check
      _
    $region15: #{tpu_custom_call.1} parent=1 // pred_check_branch
      %36 = sbr.rel (0) target = $region17
    $region16: #{tpu_custom_call.1} parent=1 // pred_region
      %37 = dma.done [#allocation3], 1024
    $region17: #{tpu_custom_call.1} parent=1 // pred_fallthru
      _
    %38 = sfence
    %s39 = sadd.s32 0, 0
    %p40 = scmp.eq.s32.totalorder 0, 0
    // Predicated region
    $region18: #{tpu_custom_call.1} parent=1 // pred_check
      %p41 = pneg %p40
    $region19: #{tpu_custom_call.1} parent=1 // pred_check_branch
      %43 = sbr.rel (%p41) target = $region21
    $region20: #{tpu_custom_call.1} parent=1 // pred_region
      %44 = vst [vmem:[#allocation7] sm:$0xff] 0.0
    $region21: #{tpu_custom_call.1} parent=1 // pred_fallthru
      _
    %v45 = vld [vmem:[#allocation6] sm:$0xff]
    %v46 = vld [vmem:[#allocation6 + $0x8] sm:$0xff]
    %v47 = vld [vmem:[#allocation6 + $0x10] sm:$0xff]
    %v48 = vld [vmem:[#allocation6 + $0x18] sm:$0xff]
    %v49 = vld [vmem:[#allocation6 + $0x20] sm:$0xff]
    %v50 = vld [vmem:[#allocation6 + $0x28] sm:$0xff]
    %v51 = vld [vmem:[#allocation6 + $0x30] sm:$0xff]
    %v52 = vld [vmem:[#allocation6 + $0x38] sm:$0xff]
    %s53 = sld [smem:[#allocation2]]
    %s54 = sld [smem:[#allocation2 + $0x1]]
    %v55 = vstv %s54
    %v56 = vsub.f32 %v45, %v55
    %v57 = vsub.f32 %v46, %v55
    %v58 = vsub.f32 %v47, %v55
    %v59 = vsub.f32 %v48, %v55
    %v60 = vsub.f32 %v49, %v55
    %v61 = vsub.f32 %v50, %v55
    %v62 = vsub.f32 %v51, %v55
    %v63 = vsub.f32 %v52, %v55
    %v64 = vmax.f32 %v56, 0.0
    %v65 = vmax.f32 %v57, 0.0
    %v66 = vmax.f32 %v58, 0.0
    %v67 = vmax.f32 %v59, 0.0
    %v68 = vmax.f32 %v60, 0.0
    %v69 = vmax.f32 %v61, 0.0
    %v70 = vmax.f32 %v62, 0.0
    %v71 = vmax.f32 %v63, 0.0
    %v72 = vstv %s53
    %v73 = vsub.f32 %v72, %v45
    %v74 = vsub.f32 %v72, %v46
    %v75 = vsub.f32 %v72, %v47
    %v76 = vsub.f32 %v72, %v48
    %v77 = vsub.f32 %v72, %v49
    %v78 = vsub.f32 %v72, %v50
    %v79 = vsub.f32 %v72, %v51
    %v80 = vsub.f32 %v72, %v52
    %v81 = vmax.f32 %v73, 0.0
    %v82 = vmax.f32 %v74, 0.0
    %v83 = vmax.f32 %v75, 0.0
    %v84 = vmax.f32 %v76, 0.0
    %v85 = vmax.f32 %v77, 0.0
    %v86 = vmax.f32 %v78, 0.0
    %v87 = vmax.f32 %v79, 0.0
    %v88 = vmax.f32 %v80, 0.0
    %v89 = vadd.f32 %v64, %v81
    %v90 = vadd.f32 %v65, %v82
    %v91 = vadd.f32 %v66, %v83
    %v92 = vadd.f32 %v67, %v84
    %v93 = vadd.f32 %v68, %v85
    %v94 = vadd.f32 %v69, %v86
    %v95 = vadd.f32 %v70, %v87
    %v96 = vadd.f32 %v71, %v88
    %s97 = sadd.s32 0, 0
    %s98 = sadd.s32 %s97, 1
    %s99 = smul.u32 %s98, 8192
    %p100 = scmp.le.s32.totalorder %s99, 2500
    // Predicated region
    $region22: #{tpu_custom_call.1} parent=1 // pred_check
      %p101 = pneg %p100
    $region23: #{tpu_custom_call.1} parent=1 // pred_check_branch
      %103 = sbr.rel (%p101) target = $region25
    $region24: #{tpu_custom_call.1} parent=1 // pred_region
      %v104 = vld [vmem:[#allocation7] sm:$0xff]
      %v105 = vadd.f32 %v89, %v90
      %v106 = vadd.f32 %v105, %v91
      %v107 = vadd.f32 %v106, %v92
      %v108 = vadd.f32 %v107, %v93
      %v109 = vadd.f32 %v108, %v94
      %v110 = vadd.f32 %v109, %v95
      %v111 = vadd.f32 %v110, %v96
      %112 = vadd.xlane.f32.xlu0 %v111
      %v113 = vpop.xlane.xlu0 %112
      %v114 = vrot.slane %v113, 4
      %v115 = vadd.f32 %v113, %v114
      %v116 = vrot.slane %v115, 2
      %v117 = vadd.f32 %v115, %v116
      %v118 = vrot.slane %v117, 1
      %v119 = vadd.f32 %v117, %v118
      %s120 = vtos %v119
      %v121 = vstv %s120
      %v122 = vadd.f32 %v104, %v121
      %123 = vst [vmem:[#allocation7] sm:$0xff] %v122
    $region25: #{tpu_custom_call.1} parent=1 // pred_fallthru
      _
    %p124 = scmp.gt.s32.totalorder %s99, 2500
    // Predicated region
    $region26: #{tpu_custom_call.1} parent=1 // pred_check
      %p125 = pneg %p124
    $region27: #{tpu_custom_call.1} parent=1 // pred_check_branch
      %127 = sbr.rel (%p125) target = $region29
    $region28: #{tpu_custom_call.1} parent=1 // pred_region
      %v128 = vlaneseq
      %v129 = vshrl.u32 %v128, 7
      %v130 = vlaneseq
      %v131 = vand.u32 %v130, 127
      %v132 = vadd.s32 %v131, 128
      %v133 = vadd.s32 %v131, 256
      %v134 = vadd.s32 %v131, 384
      %v135 = vadd.s32 %v131, 512
      %v136 = vadd.s32 %v131, 640
      %v137 = vadd.s32 %v131, 768
      %v138 = vadd.s32 %v131, 896
      %s139 = smul.u32 %s97, 8192
      %v140 = vmul.u32 %v129, 1024
      %v141 = vstv %s139
      %v142 = vadd.s32 %v141, %v140
      %v143 = vadd.s32 %v142, %v131
      %v144 = vadd.s32 %v142, %v132
      %v145 = vadd.s32 %v142, %v133
      %v146 = vadd.s32 %v142, %v134
      %v147 = vadd.s32 %v142, %v135
      %v148 = vadd.s32 %v142, %v136
      %v149 = vadd.s32 %v142, %v137
      %v150 = vadd.s32 %v142, %v138
      %v151 = vld [vmem:[#allocation7] sm:$0xff]
      %vm152 = vcmp.lt.s32.totalorder %v143, 2500
      %vm153 = vcmp.lt.s32.totalorder %v144, 2500
      %vm154 = vcmp.lt.s32.totalorder %v145, 2500
      %vm155 = vcmp.lt.s32.totalorder %v146, 2500
      %vm156 = vcmp.lt.s32.totalorder %v147, 2500
      %vm157 = vcmp.lt.s32.totalorder %v148, 2500
      %vm158 = vcmp.lt.s32.totalorder %v149, 2500
      %vm159 = vcmp.lt.s32.totalorder %v150, 2500
      %v160 = vsel %vm152, %v89, 0.0
      %v161 = vsel %vm153, %v90, 0.0
      %v162 = vsel %vm154, %v91, 0.0
      %v163 = vsel %vm155, %v92, 0.0
      %v164 = vsel %vm156, %v93, 0.0
      %v165 = vsel %vm157, %v94, 0.0
      %v166 = vsel %vm158, %v95, 0.0
      %v167 = vsel %vm159, %v96, 0.0
      %v168 = vadd.f32 %v160, %v161
      %v169 = vadd.f32 %v168, %v162
      %v170 = vadd.f32 %v169, %v163
      %v171 = vadd.f32 %v170, %v164
      %v172 = vadd.f32 %v171, %v165
      %v173 = vadd.f32 %v172, %v166
      %v174 = vadd.f32 %v173, %v167
      %175 = vadd.xlane.f32.xlu0 %v174
      %v176 = vpop.xlane.xlu0 %175
      %v177 = vrot.slane %v176, 4
      %v178 = vadd.f32 %v176, %v177
      %v179 = vrot.slane %v178, 2
      %v180 = vadd.f32 %v178, %v179
      %v181 = vrot.slane %v180, 1
      %v182 = vadd.f32 %v180, %v181
      %s183 = vtos %v182
      %v184 = vstv %s183
      %v185 = vadd.f32 %v151, %v184
      %186 = vst [vmem:[#allocation7] sm:$0xff] %v185
    $region29: #{tpu_custom_call.1} parent=1 // pred_fallthru
      _
    // Predicated region
    $region30: #{tpu_custom_call.1} parent=1 // pred_check
      _
    $region31: #{tpu_custom_call.1} parent=1 // pred_check_branch
      %188 = sbr.rel (0) target = $region33
    $region32: #{tpu_custom_call.1} parent=1 // pred_region
      %s190 = ssub.s32 128, 128
      %191 = vsyncadd [#allocation4], %s190
      %s193 = sshll.u32 [#allocation7], 4
      %s194 = int_to_ptr.vmem [resolvable:$true] %s193
      %196 = dma.vmem_to_hbm [thread:$0]  %s194, 128, %s2, [#allocation4]
    $region33: #{tpu_custom_call.1} parent=1 // pred_fallthru
      _
    // Predicated region
    $region34: #{tpu_custom_call.1} parent=1 // pred_check
      _
    $region35: #{tpu_custom_call.1} parent=1 // pred_check_branch
      %198 = sbr.rel (0) target = $region37
    $region36: #{tpu_custom_call.1} parent=1 // pred_region
      %199 = dma.done [#allocation4], 128
    $region37: #{tpu_custom_call.1} parent=1 // pred_fallthru
      _
    %200 = vsyncpa [#allocation3], 1
    %201 = vsyncpa [#allocation4], 1
    %202 = vsyncpa [#allocation5], 1

</llo_original>
